<compile_context>
chip_gen: v7x
topology: tpu7x:2x2x1
jax: 0.10.0
libtpu: 0.0.40
codegen_flags: <defaults>
</compile_context>

<pallas_src>
import functools

import jax
import jax.numpy as jnp
from jax import lax
from jax.experimental import pallas as pl
from jax.experimental.pallas import tpu as pltpu

FEAT_PAD = 128   # feature dim padded to a lane-dense 128
EPS = 1e-6       # torch.nn.functional.pairwise_distance eps (added to diff)


# ----------------------------------------------------------------------------
# Fused Pallas kernel: backbone (both passes) + pairwise L2 distance
# ----------------------------------------------------------------------------
def _fused_siamese_kernel(xs_ref, xt_ref, w1_ref, b1_ref, w2_ref, b2_ref,
                          o_ref, *, feat):
    # xs : [N, D]          bf16  support images (flattened)
    # xt : [N, D]          bf16  target images (flattened)
    # w1 : [D, HIDDEN]     bf16
    # b1 : [1, HIDDEN]     f32
    # w2 : [HIDDEN, FEAT_PAD] bf16 (zero-padded beyond `feat`)
    # b2 : [1, FEAT_PAD]   f32       (zero-padded beyond `feat`)
    # o  : [N, FEAT_PAD]   f32   (per-row distance broadcast across lanes)
    w1 = w1_ref[...]
    b1 = b1_ref[...]
    w2 = w2_ref[...]
    b2 = b2_ref[...]

    def backbone(x):
        h = jnp.dot(x, w1, preferred_element_type=jnp.float32)
        h = jnp.maximum(h + b1, 0.0)
        f = jnp.dot(h.astype(jnp.bfloat16), w2,
                    preferred_element_type=jnp.float32)
        return f + b2

    sup = backbone(xs_ref[...])          # [N, FEAT_PAD] f32
    tgt = backbone(xt_ref[...])          # [N, FEAT_PAD] f32

    # Mask padded feature columns so they do not contribute eps^2 terms
    # (eps is only added to real feature columns, matching torch semantics).
    col = lax.broadcasted_iota(jnp.int32, sup.shape, 1)
    diff = jnp.where(col < feat, sup - tgt + EPS, 0.0)
    dist = jnp.sqrt(jnp.sum(diff * diff, axis=-1, keepdims=True))   # [N, 1]

    # Lane-dense store: broadcast the distance across 128 lanes.
    o_ref[...] = jnp.broadcast_to(dist, o_ref.shape)


# ----------------------------------------------------------------------------
# Model wrapper (mirrors SiameseNetwork.forward semantics)
# ----------------------------------------------------------------------------
class SiameseNetworkPallas:
    """Fused Siamese forward: synthetic MLP backbone + pairwise L2 distance."""

    def __init__(self, params):
        w1, b1, w2, b2 = params
        self.d_in, self.hidden = w1.shape
        hidden2, feat = w2.shape
        assert hidden2 == self.hidden and feat <= FEAT_PAD
        self.feat = feat
        # Matmul operands in bf16; biases stay f32. w2/b2 zero-padded to
        # 128 output lanes (lane-dense, v5e-MXU-width friendly).
        self.w1 = w1.astype(jnp.bfloat16)
        self.b1 = b1.astype(jnp.float32)
        self.w2 = jnp.pad(w2, ((0, 0), (0, FEAT_PAD - feat))).astype(jnp.bfloat16)
        self.b2 = jnp.pad(b2, ((0, 0), (0, FEAT_PAD - feat))).astype(jnp.float32)

    def __call__(self, support_images, context_labels, target_images,
                 target_labels=None):
        # TODO(synk): the original backbone is user-supplied and may use the
        # label arguments; this synthetic MLP backbone ignores them, so the
        # target_labels branch only mirrors the PyTorch control flow.
        if target_labels is None or target_labels.size == 0:
            _labels_for_target = context_labels
        else:
            _labels_for_target = target_labels
        del _labels_for_target

        n = support_images.shape[0]
        # Cast once, directly to the matmul operand dtype (no f32 detour,
        # no row padding / concat — full-array blocks are exempt from the
        # (8,128) divisibility rule).
        sup = support_images.reshape(n, -1).astype(jnp.bfloat16)   # [N, D]
        tgt = target_images.reshape(n, -1).astype(jnp.bfloat16)    # [N, D]

        rows = 2 * n
        flops = (2 * rows * self.d_in * self.hidden
                 + 2 * rows * self.hidden * FEAT_PAD)
        bytes_accessed = (
            2 * (sup.size + tgt.size + self.w1.size + self.w2.size)   # bf16
            + 4 * (self.b1.size + self.b2.size + n * FEAT_PAD))       # f32
        cost = pl.CostEstimate(flops=flops, transcendentals=n,
                               bytes_accessed=bytes_accessed)

        kernel = functools.partial(_fused_siamese_kernel, feat=self.feat)
        out = pl.pallas_call(
            kernel,
            out_shape=jax.ShapeDtypeStruct((n, FEAT_PAD), jnp.float32),
            grid=(1,),
            in_specs=[
                pl.BlockSpec(sup.shape, lambda i: (0, 0)),
                pl.BlockSpec(tgt.shape, lambda i: (0, 0)),
                pl.BlockSpec(self.w1.shape, lambda i: (0, 0)),
                pl.BlockSpec(self.b1.shape, lambda i: (0, 0)),
                pl.BlockSpec(self.w2.shape, lambda i: (0, 0)),
                pl.BlockSpec(self.b2.shape, lambda i: (0, 0)),
            ],
            out_specs=pl.BlockSpec((n, FEAT_PAD), lambda i: (0, 0)),
            compiler_params=pltpu.CompilerParams(
                dimension_semantics=("arbitrary",)),
            cost_estimate=cost,
        )(sup, tgt, self.w1, self.b1, self.w2, self.b2)

        return out[:, 0]   # [N] distances (keepdim=False)


# ----------------------------------------------------------------------------
# Main
# ----------------------------------------------------------------------------
if __name__ == "__main__":
    N, C, H, W = 2, 4, 16, 16       # small NCHW images
    D = C * H * W                   # 1024 flattened features
    HIDDEN = 128
    FEAT = 32

    key = jax.random.PRNGKey(0)
    k_sup, k_tgt, k_w1, k_b1, k_w2, k_b2 = jax.random.split(key, 6)

    support_images = jax.random.normal(k_sup, (N, C, H, W), dtype=jnp.float32)
    target_images = jax.random.normal(k_tgt, (N, C, H, W), dtype=jnp.float32)
    context_labels = jnp.arange(N, dtype=jnp.int32) % 2
    target_labels = jnp.empty((0,), dtype=jnp.int32)   # numel()==0 path

    # Deterministic synthetic backbone parameters.
    w1 = jax.random.normal(k_w1, (D, HIDDEN), dtype=jnp.float32) * 0.02
    b1 = jax.random.normal(k_b1, (1, HIDDEN), dtype=jnp.float32) * 0.01
    w2 = jax.random.normal(k_w2, (HIDDEN, FEAT), dtype=jnp.float32) * 0.05
    b2 = jax.random.normal(k_b2, (1, FEAT), dtype=jnp.float32) * 0.01

    model = SiameseNetworkPallas((w1, b1, w2, b2))
    distance = model(support_images, context_labels, target_images,
                     target_labels)
    distance = jax.block_until_ready(distance)

    # Pure-JAX reference matching the kernel's bf16 matmul operands
    # (f32 accumulation), for a tight numerical check.
    def ref_feats(imgs):
        x = imgs.reshape(imgs.shape[0], -1).astype(jnp.bfloat16).astype(jnp.float32)
        w1f = w1.astype(jnp.bfloat16).astype(jnp.float32)
        h = jnp.maximum(
            jnp.dot(x, w1f, precision=lax.Precision.HIGHEST) + b1, 0.0)
        hf = h.astype(jnp.bfloat16).astype(jnp.float32)
        w2f = w2.astype(jnp.bfloat16).astype(jnp.float32)
        return jnp.dot(hf, w2f, precision=lax.Precision.HIGHEST) + b2

    ref = jnp.sqrt(jnp.sum(
        (ref_feats(support_images) - ref_feats(target_images) + EPS) ** 2,
        axis=-1))
    assert distance.shape == (N,)
    assert jnp.allclose(distance, ref, rtol=5e-3, atol=5e-3), (distance, ref)

    print("KERNEL_OK")
</pallas_src>

<mosaic_0001>
module attributes {stable_mosaic.version = 11 : i64} {
  func.func @_fused_siamese_kernel(%arg0: i32, %arg1: memref<2x1024xbf16, #tpu.memory_space<vmem>>, %arg2: memref<2x1024xbf16, #tpu.memory_space<vmem>>, %arg3: memref<1024x128xbf16, #tpu.memory_space<vmem>>, %arg4: memref<1x128xf32, #tpu.memory_space<vmem>>, %arg5: memref<128x128xbf16, #tpu.memory_space<vmem>>, %arg6: memref<1x128xf32, #tpu.memory_space<vmem>>, %arg7: memref<2x128xf32, #tpu.memory_space<vmem>>) attributes {dimension_semantics = [#tpu.dimension_semantics<arbitrary>], iteration_bounds = array<i64: 1>, scalar_prefetch = 0 : i64, scratch_operands = 0 : i64, tpu.core_type = #tpu.core_type<tc>, window_params = [{pipeline_mode = #tpu.pipeline_mode<synchronous>, transform_indices = @transform_0, window_bounds = array<i64: 2, 1024>}, {pipeline_mode = #tpu.pipeline_mode<synchronous>, transform_indices = @transform_1, window_bounds = array<i64: 2, 1024>}, {pipeline_mode = #tpu.pipeline_mode<synchronous>, transform_indices = @transform_2, window_bounds = array<i64: 1024, 128>}, {pipeline_mode = #tpu.pipeline_mode<synchronous>, transform_indices = @transform_3, window_bounds = array<i64: 1, 128>}, {pipeline_mode = #tpu.pipeline_mode<synchronous>, transform_indices = @transform_4, window_bounds = array<i64: 128, 128>}, {pipeline_mode = #tpu.pipeline_mode<synchronous>, transform_indices = @transform_5, window_bounds = array<i64: 1, 128>}, {pipeline_mode = #tpu.pipeline_mode<synchronous>, transform_indices = @transform_6, window_bounds = array<i64: 2, 128>}]} {
    %c0 = arith.constant 0 : index
    %c0_0 = arith.constant 0 : index
    %0 = vector.load %arg3[%c0, %c0_0] : memref<1024x128xbf16, #tpu.memory_space<vmem>>, vector<1024x128xbf16>
    %c0_1 = arith.constant 0 : index
    %c0_2 = arith.constant 0 : index
    %1 = vector.load %arg4[%c0_1, %c0_2] : memref<1x128xf32, #tpu.memory_space<vmem>>, vector<1x128xf32>
    %c0_3 = arith.constant 0 : index
    %c0_4 = arith.constant 0 : index
    %2 = vector.load %arg5[%c0_3, %c0_4] : memref<128x128xbf16, #tpu.memory_space<vmem>>, vector<128x128xbf16>
    %c0_5 = arith.constant 0 : index
    %c0_6 = arith.constant 0 : index
    %3 = vector.load %arg6[%c0_5, %c0_6] : memref<1x128xf32, #tpu.memory_space<vmem>>, vector<1x128xf32>
    %c0_7 = arith.constant 0 : index
    %c0_8 = arith.constant 0 : index
    %4 = vector.load %arg1[%c0_7, %c0_8] : memref<2x1024xbf16, #tpu.memory_space<vmem>>, vector<2x1024xbf16>
    %cst = arith.constant dense<0.000000e+00> : vector<2x128xf32>
    %5 = tpu.matmul %4, %0, %cst {dimension_numbers = #tpu.dot_dimension_numbers<[1], [0], [0], [1], [0, 0, 1, 1], [], []>} : vector<2x1024xbf16>, vector<1024x128xbf16>, vector<2x128xf32> -> vector<2x128xf32>
    %6 = vector.broadcast %1 : vector<1x128xf32> to vector<2x128xf32>
    %7 = arith.addf %5, %6 : vector<2x128xf32>
    %cst_9 = arith.constant 0.000000e+00 : f32
    %8 = vector.broadcast %cst_9 : f32 to vector<2x128xf32>
    %9 = arith.maximumf %7, %8 : vector<2x128xf32>
    %10 = arith.truncf %9 : vector<2x128xf32> to vector<2x128xbf16>
    %cst_10 = arith.constant dense<0.000000e+00> : vector<2x128xf32>
    %11 = tpu.matmul %10, %2, %cst_10 {dimension_numbers = #tpu.dot_dimension_numbers<[1], [0], [0], [1], [0, 0, 1, 1], [], []>} : vector<2x128xbf16>, vector<128x128xbf16>, vector<2x128xf32> -> vector<2x128xf32>
    %12 = vector.broadcast %3 : vector<1x128xf32> to vector<2x128xf32>
    %13 = arith.addf %11, %12 : vector<2x128xf32>
    %c0_11 = arith.constant 0 : index
    %c0_12 = arith.constant 0 : index
    %14 = vector.load %arg2[%c0_11, %c0_12] : memref<2x1024xbf16, #tpu.memory_space<vmem>>, vector<2x1024xbf16>
    %cst_13 = arith.constant dense<0.000000e+00> : vector<2x128xf32>
    %15 = tpu.matmul %14, %0, %cst_13 {dimension_numbers = #tpu.dot_dimension_numbers<[1], [0], [0], [1], [0, 0, 1, 1], [], []>} : vector<2x1024xbf16>, vector<1024x128xbf16>, vector<2x128xf32> -> vector<2x128xf32>
    %16 = vector.broadcast %1 : vector<1x128xf32> to vector<2x128xf32>
    %17 = arith.addf %15, %16 : vector<2x128xf32>
    %cst_14 = arith.constant 0.000000e+00 : f32
    %18 = vector.broadcast %cst_14 : f32 to vector<2x128xf32>
    %19 = arith.maximumf %17, %18 : vector<2x128xf32>
    %20 = arith.truncf %19 : vector<2x128xf32> to vector<2x128xbf16>
    %cst_15 = arith.constant dense<0.000000e+00> : vector<2x128xf32>
    %21 = tpu.matmul %20, %2, %cst_15 {dimension_numbers = #tpu.dot_dimension_numbers<[1], [0], [0], [1], [0, 0, 1, 1], [], []>} : vector<2x128xbf16>, vector<128x128xbf16>, vector<2x128xf32> -> vector<2x128xf32>
    %22 = vector.broadcast %3 : vector<1x128xf32> to vector<2x128xf32>
    %23 = arith.addf %21, %22 : vector<2x128xf32>
    %24 = tpu.iota {dimensions = array<i32: 1>} : vector<2x128xi32>
    %c32_i32 = arith.constant 32 : i32
    %25 = vector.broadcast %c32_i32 : i32 to vector<2x128xi32>
    %26 = arith.cmpi slt, %24, %25 : vector<2x128xi32>
    %27 = arith.subf %13, %23 : vector<2x128xf32>
    %cst_16 = arith.constant 9.99999997E-7 : f32
    %28 = vector.broadcast %cst_16 : f32 to vector<2x128xf32>
    %29 = arith.addf %27, %28 : vector<2x128xf32>
    %cst_17 = arith.constant 0.000000e+00 : f32
    %30 = vector.broadcast %cst_17 : f32 to vector<2x128xf32>
    %31 = arith.select %26, %29, %30 : vector<2x128xi1>, vector<2x128xf32>
    %32 = arith.mulf %31, %31 : vector<2x128xf32>
    %cst_18 = arith.constant dense<0.000000e+00> : vector<2xf32>
    %33 = vector.multi_reduction <add>, %32, %cst_18 [1] : vector<2x128xf32> to vector<2xf32>
    %34 = vector.shape_cast %33 : vector<2xf32> to vector<2x1xf32>
    %35 = math.sqrt %34 : vector<2x1xf32>
    %36 = vector.shape_cast %35 : vector<2x1xf32> to vector<2x1xf32>
    %37 = vector.broadcast %36 : vector<2x1xf32> to vector<2x128xf32>
    %c0_19 = arith.constant 0 : index
    %c0_20 = arith.constant 0 : index
    %38 = vector.load %arg7[%c0_19, %c0_20] : memref<2x128xf32, #tpu.memory_space<vmem>>, vector<2x128xf32>
    tpu.vector_store %arg7[%c0_19, %c0_20], %37 {strides = array<i32>} : memref<2x128xf32, #tpu.memory_space<vmem>>, vector<2x128xf32>,
    return
  }
  func.func @transform_0(%arg0: i32) -> (i32, i32) {
    %c0_i32 = arith.constant 0 : i32
    %c0_i32_0 = arith.constant 0 : i32
    %c0_i32_1 = arith.constant 0 : i32
    return %c0_i32, %c0_i32_0 : i32, i32
  }
  func.func @transform_1(%arg0: i32) -> (i32, i32) {
    %c0_i32 = arith.constant 0 : i32
    %c0_i32_0 = arith.constant 0 : i32
    %c0_i32_1 = arith.constant 0 : i32
    return %c0_i32, %c0_i32_0 : i32, i32
  }
  func.func @transform_2(%arg0: i32) -> (i32, i32) {
    %c0_i32 = arith.constant 0 : i32
    %c0_i32_0 = arith.constant 0 : i32
    %c0_i32_1 = arith.constant 0 : i32
    return %c0_i32, %c0_i32_0 : i32, i32
  }
  func.func @transform_3(%arg0: i32) -> (i32, i32) {
    %c0_i32 = arith.constant 0 : i32
    %c0_i32_0 = arith.constant 0 : i32
    %c0_i32_1 = arith.constant 0 : i32
    return %c0_i32, %c0_i32_0 : i32, i32
  }
  func.func @transform_4(%arg0: i32) -> (i32, i32) {
    %c0_i32 = arith.constant 0 : i32
    %c0_i32_0 = arith.constant 0 : i32
    %c0_i32_1 = arith.constant 0 : i32
    return %c0_i32, %c0_i32_0 : i32, i32
  }
  func.func @transform_5(%arg0: i32) -> (i32, i32) {
    %c0_i32 = arith.constant 0 : i32
    %c0_i32_0 = arith.constant 0 : i32
    %c0_i32_1 = arith.constant 0 : i32
    return %c0_i32, %c0_i32_0 : i32, i32
  }
  func.func @transform_6(%arg0: i32) -> (i32, i32) {
    %c0_i32 = arith.constant 0 : i32
    %c0_i32_0 = arith.constant 0 : i32
    %c0_i32_1 = arith.constant 0 : i32
    return %c0_i32, %c0_i32_0 : i32, i32
  }
}

</mosaic_0001>

<llo_original>
// kernel: tpu_custom_call.1
$region0: #{tpu_custom_call.1}
  #allocation0 [shape = 'u32[]', space=smem, size = 0x4, offset = 0x4, fixed_abs, tag = 'smem constant byte address 0x4 - core index']
  #allocation1 [shape = 'u32[144,128]{1,0:T(1,128)}', space=vmem, size = 0x12000, scoped, tag = 'internal scratch']
  %s0 = inlined_call_operand.hbm [shape: bf16[2,1024], index: 0, kind: input, shape index: {}]
  %s1 = inlined_call_operand.hbm [shape: bf16[2,1024], index: 1, kind: input, shape index: {}]
  %s2 = inlined_call_operand.hbm [shape: bf16[1024,128], index: 2, kind: input, shape index: {}]
  %s3 = inlined_call_operand.vmem [shape: f32[1,128], index: 3, kind: input, shape index: {}]
  %s4 = inlined_call_operand.hbm [shape: bf16[128,128], index: 4, kind: input, shape index: {}]
  %s5 = inlined_call_operand.vmem [shape: f32[1,128], index: 5, kind: input, shape index: {}]
  %s6 = inlined_call_operand.hbm [shape: f32[2,128], index: 6, kind: output, shape index: {}]
  %s7 = sld [smem:[#allocation0]]
  $region50: #{tpu_custom_call.1} parent=0
    _
  %s9 = ssub.s32 1, %s7
  %s10 = scalar_select 0, %s9, %s7
  $region1: #{tpu_custom_call.1} parent=0
    #allocation2 [shape = 'u8[4096]{0}', space=vmem, size = 0x1000, scoped, tag = 'input window, operand 0, single buffered']
    #allocation3 [shape = 's32[1]{0}', space=sflag, size = 0x4, scoped, tag = 'scoped memory for tpu_custom_call.1']
    #allocation4 [shape = 's32[1]{0}', space=sflag, size = 0x4, scoped, tag = 'scoped memory for tpu_custom_call.1']
    #allocation5 [shape = 'u8[4096]{0}', space=vmem, size = 0x1000, scoped, tag = 'input window, operand 1, single buffered']
    #allocation6 [shape = 's32[1]{0}', space=sflag, size = 0x4, scoped, tag = 'scoped memory for tpu_custom_call.1']
    #allocation7 [shape = 'u8[262144]{0}', space=vmem, size = 0x40000, scoped, tag = 'input window, operand 2, single buffered']
    #allocation8 [shape = 'u8[32768]{0}', space=vmem, size = 0x8000, scoped, tag = 'input window, operand 4, single buffered']
    #allocation9 [shape = 's32[1]{0}', space=sflag, size = 0x4, scoped, tag = 'scoped memory for tpu_custom_call.1']
    #allocation10 [shape = 'u8[1024]{0}', space=vmem, size = 0x400, scoped, tag = 'output window, operand 0, single buffered']
    %11 = vsyncpa [#allocation3], 0
    %12 = vsyncpa [#allocation6], 0
    %13 = vsyncpa [#allocation9], 0
    %14 = vsyncpa [#allocation4], 0
    // Predicated region
    $region2: #{tpu_custom_call.1} parent=1 // pred_check
      _
    $region3: #{tpu_custom_call.1} parent=1 // pred_check_branch
      %16 = sbr.rel (0) target = $region5
    $region4: #{tpu_custom_call.1} parent=1 // pred_region
      %s18 = ssub.s32 128, 128
      %19 = vsyncadd [#allocation3], %s18
      %s21 = sshll.u32 [#allocation2], 4
      %s22 = int_to_ptr.vmem [resolvable:$true] %s21
      %24 = dma.hbm_to_vmem [thread:$0]  %s0, 128, %s22, [#allocation3]
    $region5: #{tpu_custom_call.1} parent=1 // pred_fallthru
      _
    // Predicated region
    $region6: #{tpu_custom_call.1} parent=1 // pred_check
      _
    $region7: #{tpu_custom_call.1} parent=1 // pred_check_branch
      %26 = sbr.rel (0) target = $region9
    $region8: #{tpu_custom_call.1} parent=1 // pred_region
      %s28 = ssub.s32 128, 128
      %29 = vsyncadd [#allocation6], %s28
      %s31 = sshll.u32 [#allocation5], 4
      %s32 = int_to_ptr.vmem [resolvable:$true] %s31
      %34 = dma.hbm_to_vmem [thread:$0]  %s1, 128, %s32, [#allocation6]
    $region9: #{tpu_custom_call.1} parent=1 // pred_fallthru
      _
    // Predicated region
    $region10: #{tpu_custom_call.1} parent=1 // pred_check
      _
    $region11: #{tpu_custom_call.1} parent=1 // pred_check_branch
      %36 = sbr.rel (0) target = $region13
    $region12: #{tpu_custom_call.1} parent=1 // pred_region
      %s38 = ssub.s32 8192, 8192
      %39 = vsyncadd [#allocation6], %s38
      %s40 = sshll.u32 [#allocation7], 4
      %s41 = int_to_ptr.vmem [resolvable:$true] %s40
      %46 = dma.hbm_to_vmem [thread:$0]  %s2, 8192, %s41, [#allocation6], 64, 64, 4
    $region13: #{tpu_custom_call.1} parent=1 // pred_fallthru
      _
    // Predicated region
    $region14: #{tpu_custom_call.1} parent=1 // pred_check
      _
    $region15: #{tpu_custom_call.1} parent=1 // pred_check_branch
      %48 = sbr.rel (0) target = $region17
    $region16: #{tpu_custom_call.1} parent=1 // pred_region
      _
    $region17: #{tpu_custom_call.1} parent=1 // pred_fallthru
      _
    // Predicated region
    $region18: #{tpu_custom_call.1} parent=1 // pred_check
      _
    $region19: #{tpu_custom_call.1} parent=1 // pred_check_branch
      %50 = sbr.rel (0) target = $region21
    $region20: #{tpu_custom_call.1} parent=1 // pred_region
      %s52 = ssub.s32 1024, 1024
      %53 = vsyncadd [#allocation9], %s52
      %s54 = sshll.u32 [#allocation8], 4
      %s55 = int_to_ptr.vmem [resolvable:$true] %s54
      %60 = dma.hbm_to_vmem [thread:$0]  %s4, 1024, %s55, [#allocation9], 64, 64, 4
    $region21: #{tpu_custom_call.1} parent=1 // pred_fallthru
      _
    // Predicated region
    $region22: #{tpu_custom_call.1} parent=1 // pred_check
      _
    $region23: #{tpu_custom_call.1} parent=1 // pred_check_branch
      %62 = sbr.rel (0) target = $region25
    $region24: #{tpu_custom_call.1} parent=1 // pred_region
      _
    $region25: #{tpu_custom_call.1} parent=1 // pred_fallthru
      _
    // Predicated region
    $region26: #{tpu_custom_call.1} parent=1 // pred_check
      _
    $region27: #{tpu_custom_call.1} parent=1 // pred_check_branch
      %64 = sbr.rel (0) target = $region29
    $region28: #{tpu_custom_call.1} parent=1 // pred_region
      %65 = dma.done [#allocation3], 128
    $region29: #{tpu_custom_call.1} parent=1 // pred_fallthru
      _
    // Predicated region
    $region30: #{tpu_custom_call.1} parent=1 // pred_check
      _
    $region31: #{tpu_custom_call.1} parent=1 // pred_check_branch
      %67 = sbr.rel (0) target = $region33
    $region32: #{tpu_custom_call.1} parent=1 // pred_region
      %68 = dma.done [#allocation6], 128
    $region33: #{tpu_custom_call.1} parent=1 // pred_fallthru
      _
    // Predicated region
    $region34: #{tpu_custom_call.1} parent=1 // pred_check
      _
    $region35: #{tpu_custom_call.1} parent=1 // pred_check_branch
      %70 = sbr.rel (0) target = $region37
    $region36: #{tpu_custom_call.1} parent=1 // pred_region
      %71 = dma.done [#allocation6], 8192
    $region37: #{tpu_custom_call.1} parent=1 // pred_fallthru
      _
    // Predicated region
    $region38: #{tpu_custom_call.1} parent=1 // pred_check
      _
    $region39: #{tpu_custom_call.1} parent=1 // pred_check_branch
      %73 = sbr.rel (0) target = $region41
    $region40: #{tpu_custom_call.1} parent=1 // pred_region
      %74 = dma.done [#allocation9], 1024
    $region41: #{tpu_custom_call.1} parent=1 // pred_fallthru
      _
    %v76 = vld [vmem:[#allocation7] sm:$0xf]
    %v77 = vld [vmem:[#allocation7 + $0x4] sm:$0xf]
    %v78 = vld [vmem:[#allocation7 + $0x8] sm:$0xf]
    %v79 = vld [vmem:[#allocation7 + $0xc] sm:$0xf]
    %v80 = vld [vmem:[#allocation7 + $0x10] sm:$0xf]
    %v81 = vld [vmem:[#allocation7 + $0x14] sm:$0xf]
    %v82 = vld [vmem:[#allocation7 + $0x18] sm:$0xf]
    %v83 = vld [vmem:[#allocation7 + $0x1c] sm:$0xf]
    %v84 = vld [vmem:[#allocation7 + $0x20] sm:$0xf]
    %v85 = vld [vmem:[#allocation7 + $0x24] sm:$0xf]
    %v86 = vld [vmem:[#allocation7 + $0x28] sm:$0xf]
    %v87 = vld [vmem:[#allocation7 + $0x2c] sm:$0xf]
    %v88 = vld [vmem:[#allocation7 + $0x30] sm:$0xf]
    %v89 = vld [vmem:[#allocation7 + $0x34] sm:$0xf]
    %v90 = vld [vmem:[#allocation7 + $0x38] sm:$0xf]
    %v91 = vld [vmem:[#allocation7 + $0x3c] sm:$0xf]
    %v92 = vld [vmem:[#allocation7 + $0x40] sm:$0xf]
    %v93 = vld [vmem:[#allocation7 + $0x44] sm:$0xf]
    %v94 = vld [vmem:[#allocation7 + $0x48] sm:$0xf]
    %v95 = vld [vmem:[#allocation7 + $0x4c] sm:$0xf]
    %v96 = vld [vmem:[#allocation7 + $0x50] sm:$0xf]
    %v97 = vld [vmem:[#allocation7 + $0x54] sm:$0xf]
    %v98 = vld [vmem:[#allocation7 + $0x58] sm:$0xf]
    %v99 = vld [vmem:[#allocation7 + $0x5c] sm:$0xf]
    %v100 = vld [vmem:[#allocation7 + $0x60] sm:$0xf]
    %v101 = vld [vmem:[#allocation7 + $0x64] sm:$0xf]
    %v102 = vld [vmem:[#allocation7 + $0x68] sm:$0xf]
    %v103 = vld [vmem:[#allocation7 + $0x6c] sm:$0xf]
    %v104 = vld [vmem:[#allocation7 + $0x70] sm:$0xf]
    %v105 = vld [vmem:[#allocation7 + $0x74] sm:$0xf]
    %v106 = vld [vmem:[#allocation7 + $0x78] sm:$0xf]
    %v107 = vld [vmem:[#allocation7 + $0x7c] sm:$0xf]
    %v108 = vld [vmem:[#allocation7 + $0x80] sm:$0xf]
    %v109 = vld [vmem:[#allocation7 + $0x84] sm:$0xf]
    %v110 = vld [vmem:[#allocation7 + $0x88] sm:$0xf]
    %v111 = vld [vmem:[#allocation7 + $0x8c] sm:$0xf]
    %v112 = vld [vmem:[#allocation7 + $0x90] sm:$0xf]
    %v113 = vld [vmem:[#allocation7 + $0x94] sm:$0xf]
    %v114 = vld [vmem:[#allocation7 + $0x98] sm:$0xf]
    %v115 = vld [vmem:[#allocation7 + $0x9c] sm:$0xf]
    %v116 = vld [vmem:[#allocation7 + $0xa0] sm:$0xf]
    %v117 = vld [vmem:[#allocation7 + $0xa4] sm:$0xf]
    %v118 = vld [vmem:[#allocation7 + $0xa8] sm:$0xf]
    %v119 = vld [vmem:[#allocation7 + $0xac] sm:$0xf]
    %v120 = vld [vmem:[#allocation7 + $0xb0] sm:$0xf]
    %v121 = vld [vmem:[#allocation7 + $0xb4] sm:$0xf]
    %v122 = vld [vmem:[#allocation7 + $0xb8] sm:$0xf]
    %v123 = vld [vmem:[#allocation7 + $0xbc] sm:$0xf]
    %v124 = vld [vmem:[#allocation7 + $0xc0] sm:$0xf]
    %v125 = vld [vmem:[#allocation7 + $0xc4] sm:$0xf]
    %v126 = vld [vmem:[#allocation7 + $0xc8] sm:$0xf]
    %v127 = vld [vmem:[#allocation7 + $0xcc] sm:$0xf]
    %v128 = vld [vmem:[#allocation7 + $0xd0] sm:$0xf]
    %v129 = vld [vmem:[#allocation7 + $0xd4] sm:$0xf]
    %v130 = vld [vmem:[#allocation7 + $0xd8] sm:$0xf]
    %v131 = vld [vmem:[#allocation7 + $0xdc] sm:$0xf]
    %v132 = vld [vmem:[#allocation7 + $0xe0] sm:$0xf]
    %v133 = vld [vmem:[#allocation7 + $0xe4] sm:$0xf]
    %v134 = vld [vmem:[#allocation7 + $0xe8] sm:$0xf]
    %v135 = vld [vmem:[#allocation7 + $0xec] sm:$0xf]
    %v136 = vld [vmem:[#allocation7 + $0xf0] sm:$0xf]
    %v137 = vld [vmem:[#allocation7 + $0xf4] sm:$0xf]
    %v138 = vld [vmem:[#allocation7 + $0xf8] sm:$0xf]
    %v139 = vld [vmem:[#allocation7 + $0xfc] sm:$0xf]
    %v140 = vld [vmem:[#allocation7 + $0x100] sm:$0xf]
    %v141 = vld [vmem:[#allocation7 + $0x104] sm:$0xf]
    %v142 = vld [vmem:[#allocation7 + $0x108] sm:$0xf]
    %v143 = vld [vmem:[#allocation7 + $0x10c] sm:$0xf]
    %v144 = vld [vmem:[#allocation7 + $0x110] sm:$0xf]
    %v145 = vld [vmem:[#allocation7 + $0x114] sm:$0xf]
    %v146 = vld [vmem:[#allocation7 + $0x118] sm:$0xf]
    %v147 = vld [vmem:[#allocation7 + $0x11c] sm:$0xf]
    %v148 = vld [vmem:[#allocation7 + $0x120] sm:$0xf]
    %v149 = vld [vmem:[#allocation7 + $0x124] sm:$0xf]
    %v150 = vld [vmem:[#allocation7 + $0x128] sm:$0xf]
    %v151 = vld [vmem:[#allocation7 + $0x12c] sm:$0xf]
    %v152 = vld [vmem:[#allocation7 + $0x130] sm:$0xf]
    %v153 = vld [vmem:[#allocation7 + $0x134] sm:$0xf]
    %v154 = vld [vmem:[#allocation7 + $0x138] sm:$0xf]
    %v155 = vld [vmem:[#allocation7 + $0x13c] sm:$0xf]
    %v156 = vld [vmem:[#allocation7 + $0x140] sm:$0xf]
    %v157 = vld [vmem:[#allocation7 + $0x144] sm:$0xf]
    %v158 = vld [vmem:[#allocation7 + $0x148] sm:$0xf]
    %v159 = vld [vmem:[#allocation7 + $0x14c] sm:$0xf]
    %v160 = vld [vmem:[#allocation7 + $0x150] sm:$0xf]
    %v161 = vld [vmem:[#allocation7 + $0x154] sm:$0xf]
    %v162 = vld [vmem:[#allocation7 + $0x158] sm:$0xf]
    %v163 = vld [vmem:[#allocation7 + $0x15c] sm:$0xf]
    %v164 = vld [vmem:[#allocation7 + $0x160] sm:$0xf]
    %v165 = vld [vmem:[#allocation7 + $0x164] sm:$0xf]
    %v166 = vld [vmem:[#allocation7 + $0x168] sm:$0xf]
    %v167 = vld [vmem:[#allocation7 + $0x16c] sm:$0xf]
    %v168 = vld [vmem:[#allocation7 + $0x170] sm:$0xf]
    %v169 = vld [vmem:[#allocation7 + $0x174] sm:$0xf]
    %v170 = vld [vmem:[#allocation7 + $0x178] sm:$0xf]
    %v171 = vld [vmem:[#allocation7 + $0x17c] sm:$0xf]
    %v172 = vld [vmem:[#allocation7 + $0x180] sm:$0xf]
    %v173 = vld [vmem:[#allocation7 + $0x184] sm:$0xf]
    %v174 = vld [vmem:[#allocation7 + $0x188] sm:$0xf]
    %v175 = vld [vmem:[#allocation7 + $0x18c] sm:$0xf]
    %v176 = vld [vmem:[#allocation7 + $0x190] sm:$0xf]
    %v177 = vld [vmem:[#allocation7 + $0x194] sm:$0xf]
    %v178 = vld [vmem:[#allocation7 + $0x198] sm:$0xf]
    %v179 = vld [vmem:[#allocation7 + $0x19c] sm:$0xf]
    %v180 = vld [vmem:[#allocation7 + $0x1a0] sm:$0xf]
    %v181 = vld [vmem:[#allocation7 + $0x1a4] sm:$0xf]
    %v182 = vld [vmem:[#allocation7 + $0x1a8] sm:$0xf]
    %v183 = vld [vmem:[#allocation7 + $0x1ac] sm:$0xf]
    %v184 = vld [vmem:[#allocation7 + $0x1b0] sm:$0xf]
    %v185 = vld [vmem:[#allocation7 + $0x1b4] sm:$0xf]
    %v186 = vld [vmem:[#allocation7 + $0x1b8] sm:$0xf]
    %v187 = vld [vmem:[#allocation7 + $0x1bc] sm:$0xf]
    %v188 = vld [vmem:[#allocation7 + $0x1c0] sm:$0xf]
    %v189 = vld [vmem:[#allocation7 + $0x1c4] sm:$0xf]
    %v190 = vld [vmem:[#allocation7 + $0x1c8] sm:$0xf]
    %v191 = vld [vmem:[#allocation7 + $0x1cc] sm:$0xf]
    %v192 = vld [vmem:[#allocation7 + $0x1d0] sm:$0xf]
    %v193 = vld [vmem:[#allocation7 + $0x1d4] sm:$0xf]
    %v194 = vld [vmem:[#allocation7 + $0x1d8] sm:$0xf]
    %v195 = vld [vmem:[#allocation7 + $0x1dc] sm:$0xf]
    %v196 = vld [vmem:[#allocation7 + $0x1e0] sm:$0xf]
    %v197 = vld [vmem:[#allocation7 + $0x1e4] sm:$0xf]
    %v198 = vld [vmem:[#allocation7 + $0x1e8] sm:$0xf]
    %v199 = vld [vmem:[#allocation7 + $0x1ec] sm:$0xf]
    %v200 = vld [vmem:[#allocation7 + $0x1f0] sm:$0xf]
    %v201 = vld [vmem:[#allocation7 + $0x1f4] sm:$0xf]
    %v202 = vld [vmem:[#allocation7 + $0x1f8] sm:$0xf]
    %v203 = vld [vmem:[#allocation7 + $0x1fc] sm:$0xf]
    %v204 = vld [vmem:[%s3] sm:$0x1]
    %v205 = vld [vmem:[#allocation8] sm:$0xf]
    %v206 = vld [vmem:[#allocation8 + $0x4] sm:$0xf]
    %v207 = vld [vmem:[#allocation8 + $0x8] sm:$0xf]
    %v208 = vld [vmem:[#allocation8 + $0xc] sm:$0xf]
    %v209 = vld [vmem:[#allocation8 + $0x10] sm:$0xf]
    %v210 = vld [vmem:[#allocation8 + $0x14] sm:$0xf]
    %v211 = vld [vmem:[#allocation8 + $0x18] sm:$0xf]
    %v212 = vld [vmem:[#allocation8 + $0x1c] sm:$0xf]
    %v213 = vld [vmem:[#allocation8 + $0x20] sm:$0xf]
    %v214 = vld [vmem:[#allocation8 + $0x24] sm:$0xf]
    %v215 = vld [vmem:[#allocation8 + $0x28] sm:$0xf]
    %v216 = vld [vmem:[#allocation8 + $0x2c] sm:$0xf]
    %v217 = vld [vmem:[#allocation8 + $0x30] sm:$0xf]
    %v218 = vld [vmem:[#allocation8 + $0x34] sm:$0xf]
    %v219 = vld [vmem:[#allocation8 + $0x38] sm:$0xf]
    %v220 = vld [vmem:[#allocation8 + $0x3c] sm:$0xf]
    %v221 = vld [vmem:[%s5] sm:$0x1]
    %v222 = vld [vmem:[#allocation2] sm:$0xff]
    %v224 = vlaneseq
    %v225 = vshrl.u32 %v224, 7
    %v226 = vsub.s32 0, %v225
    %v227 = vrot.slane %v204, %v226
    %v230 = vcombine.high %v222, %v222
    %v232 = vunpack.c.l.s4 1966171168
    %v233 = vunpack.c.0.s8 %v232
    %v234 = vlaneseq
    %v235 = vshrl.u32 %v234, 7
    %v236 = vsub.s32 %v233, %v235
    %v237 = vrot.slane %v222, %v236
    %v239 = vunpack.c.l.s4 1966171168
    %v240 = vunpack.c.0.s8 %v239
    %v241 = vlaneseq
    %v242 = vshrl.u32 %v241, 7
    %v243 = vsub.s32 %v240, %v242
    %v244 = vrot.slane %v230, %v243
    %v245 = vcombine.high %v237, %v237
    %v246 = vcombine.high %v244, %v244
    %v248 = vunpack.c.l.s4 1966171168
    %v249 = vunpack.c.0.s8 %v248
    %v250 = vlaneseq
    %v251 = vshrl.u32 %v250, 7
    %v252 = vsub.s32 %v249, %v251
    %v253 = vrot.slane %v237, %v252
    %v255 = vunpack.c.l.s4 1966171168
    %v256 = vunpack.c.0.s8 %v255
    %v257 = vlaneseq
    %v258 = vshrl.u32 %v257, 7
    %v259 = vsub.s32 %v256, %v258
    %v260 = vrot.slane %v244, %v259
    %v262 = vunpack.c.l.s4 1966171168
    %v263 = vunpack.c.0.s8 %v262
    %v264 = vlaneseq
    %v265 = vshrl.u32 %v264, 7
    %v266 = vsub.s32 %v263, %v265
    %v267 = vrot.slane %v245, %v266
    %v269 = vunpack.c.l.s4 1966171168
    %v270 = vunpack.c.0.s8 %v269
    %v271 = vlaneseq
    %v272 = vshrl.u32 %v271, 7
    %v273 = vsub.s32 %v270, %v272
    %v274 = vrot.slane %v246, %v273
    %v275 = vcombine.high %v253, %v253
    %v276 = vcombine.high %v260, %v260
    %v277 = vcombine.high %v267, %v267
    %v278 = vcombine.high %v274, %v274
    %v415 = vunpack.c.l.b16 %v76
    %v416 = vunpack.c.l.b16 %v77
    %v417 = vunpack.c.l.b16 %v78
    %v418 = vunpack.c.l.b16 %v79
    %v419 = vunpack.c.l.b16 %v80
    %v420 = vunpack.c.l.b16 %v81
    %v421 = vunpack.c.l.b16 %v82
    %v422 = vunpack.c.l.b16 %v83
    %v423 = vunpack.c.l.b16 %v84
    %v424 = vunpack.c.l.b16 %v85
    %v425 = vunpack.c.l.b16 %v86
    %v426 = vunpack.c.l.b16 %v87
    %v427 = vunpack.c.l.b16 %v88
    %v428 = vunpack.c.l.b16 %v89
    %v429 = vunpack.c.l.b16 %v90
    %v430 = vunpack.c.l.b16 %v91
    %v431 = vunpack.c.l.b16 %v92
    %v432 = vunpack.c.l.b16 %v93
    %v433 = vunpack.c.l.b16 %v94
    %v434 = vunpack.c.l.b16 %v95
    %v435 = vunpack.c.l.b16 %v96
    %v436 = vunpack.c.l.b16 %v97
    %v437 = vunpack.c.l.b16 %v98
    %v438 = vunpack.c.l.b16 %v99
    %v439 = vunpack.c.l.b16 %v100
    %v440 = vunpack.c.l.b16 %v101
    %v441 = vunpack.c.l.b16 %v102
    %v442 = vunpack.c.l.b16 %v103
    %v443 = vunpack.c.l.b16 %v104
    %v444 = vunpack.c.l.b16 %v105
    %v445 = vunpack.c.l.b16 %v106
    %v446 = vunpack.c.l.b16 %v107
    %v447 = vunpack.c.l.b16 %v108
    %v448 = vunpack.c.l.b16 %v109
    %v449 = vunpack.c.l.b16 %v110
    %v450 = vunpack.c.l.b16 %v111
    %v451 = vunpack.c.l.b16 %v112
    %v452 = vunpack.c.l.b16 %v113
    %v453 = vunpack.c.l.b16 %v114
    %v454 = vunpack.c.l.b16 %v115
    %v455 = vunpack.c.l.b16 %v116
    %v456 = vunpack.c.l.b16 %v117
    %v457 = vunpack.c.l.b16 %v118
    %v458 = vunpack.c.l.b16 %v119
    %v459 = vunpack.c.l.b16 %v120
    %v460 = vunpack.c.l.b16 %v121
    %v461 = vunpack.c.l.b16 %v122
    %v462 = vunpack.c.l.b16 %v123
    %v463 = vunpack.c.l.b16 %v124
    %v464 = vunpack.c.l.b16 %v125
    %v465 = vunpack.c.l.b16 %v126
    %v466 = vunpack.c.l.b16 %v127
    %v467 = vunpack.c.l.b16 %v128
    %v468 = vunpack.c.l.b16 %v129
    %v469 = vunpack.c.l.b16 %v130
    %v470 = vunpack.c.l.b16 %v131
    %v471 = vunpack.c.l.b16 %v132
    %v472 = vunpack.c.l.b16 %v133
    %v473 = vunpack.c.l.b16 %v134
    %v474 = vunpack.c.l.b16 %v135
    %v475 = vunpack.c.l.b16 %v136
    %v476 = vunpack.c.l.b16 %v137
    %v477 = vunpack.c.l.b16 %v138
    %v478 = vunpack.c.l.b16 %v139
    %v479 = vunpack.c.l.b16 %v140
    %v480 = vunpack.c.l.b16 %v141
    %v481 = vunpack.c.l.b16 %v142
    %v482 = vunpack.c.l.b16 %v143
    %v483 = vunpack.c.l.b16 %v144
    %v484 = vunpack.c.l.b16 %v145
    %v485 = vunpack.c.l.b16 %v146
    %v486 = vunpack.c.l.b16 %v147
    %v487 = vunpack.c.l.b16 %v148
    %v488 = vunpack.c.l.b16 %v149
    %v489 = vunpack.c.l.b16 %v150
    %v490 = vunpack.c.l.b16 %v151
    %v491 = vunpack.c.l.b16 %v152
    %v492 = vunpack.c.l.b16 %v153
    %v493 = vunpack.c.l.b16 %v154
    %v494 = vunpack.c.l.b16 %v155
    %v495 = vunpack.c.l.b16 %v156
    %v496 = vunpack.c.l.b16 %v157
    %v497 = vunpack.c.l.b16 %v158
    %v498 = vunpack.c.l.b16 %v159
    %v499 = vunpack.c.l.b16 %v160
    %v500 = vunpack.c.l.b16 %v161
    %v501 = vunpack.c.l.b16 %v162
    %v502 = vunpack.c.l.b16 %v163
    %v503 = vunpack.c.l.b16 %v164
    %v504 = vunpack.c.l.b16 %v165
    %v505 = vunpack.c.l.b16 %v166
    %v506 = vunpack.c.l.b16 %v167
    %v507 = vunpack.c.l.b16 %v168
    %v508 = vunpack.c.l.b16 %v169
    %v509 = vunpack.c.l.b16 %v170
    %v510 = vunpack.c.l.b16 %v171
    %v511 = vunpack.c.l.b16 %v172
    %v512 = vunpack.c.l.b16 %v173
    %v513 = vunpack.c.l.b16 %v174
    %v514 = vunpack.c.l.b16 %v175
    %v515 = vunpack.c.l.b16 %v176
    %v516 = vunpack.c.l.b16 %v177
    %v517 = vunpack.c.l.b16 %v178
    %v518 = vunpack.c.l.b16 %v179
    %v519 = vunpack.c.l.b16 %v180
    %v520 = vunpack.c.l.b16 %v181
    %v521 = vunpack.c.l.b16 %v182
    %v522 = vunpack.c.l.b16 %v183
    %v523 = vunpack.c.l.b16 %v184
    %v524 = vunpack.c.l.b16 %v185
    %v525 = vunpack.c.l.b16 %v186
    %v526 = vunpack.c.l.b16 %v187
    %v527 = vunpack.c.l.b16 %v188
    %v528 = vunpack.c.l.b16 %v189
    %v529 = vunpack.c.l.b16 %v190
    %v530 = vunpack.c.l.b16 %v191
    %v531 = vunpack.c.l.b16 %v192
    %v532 = vunpack.c.l.b16 %v193
    %v533 = vunpack.c.l.b16 %v194
    %v534 = vunpack.c.l.b16 %v195
    %v535 = vunpack.c.l.b16 %v196
    %v536 = vunpack.c.l.b16 %v197
    %v537 = vunpack.c.l.b16 %v198
    %v538 = vunpack.c.l.b16 %v199
    %v539 = vunpack.c.l.b16 %v200
    %v540 = vunpack.c.l.b16 %v201
    %v541 = vunpack.c.l.b16 %v202
    %v542 = vunpack.c.l.b16 %v203
    %v543 = vpack.c.b16 %v416, %v415
    %v544 = vpack.c.b16 %v418, %v417
    %v545 = vpack.c.b16 %v420, %v419
    %v546 = vpack.c.b16 %v422, %v421
    %v547 = vpack.c.b16 %v424, %v423
    %v548 = vpack.c.b16 %v426, %v425
    %v549 = vpack.c.b16 %v428, %v427
    %v550 = vpack.c.b16 %v430, %v429
    %v551 = vpack.c.b16 %v432, %v431
    %v552 = vpack.c.b16 %v434, %v433
    %v553 = vpack.c.b16 %v436, %v435
    %v554 = vpack.c.b16 %v438, %v437
    %v555 = vpack.c.b16 %v440, %v439
    %v556 = vpack.c.b16 %v442, %v441
    %v557 = vpack.c.b16 %v444, %v443
    %v558 = vpack.c.b16 %v446, %v445
    %v559 = vpack.c.b16 %v448, %v447
    %v560 = vpack.c.b16 %v450, %v449
    %v561 = vpack.c.b16 %v452, %v451
    %v562 = vpack.c.b16 %v454, %v453
    %v563 = vpack.c.b16 %v456, %v455
    %v564 = vpack.c.b16 %v458, %v457
    %v565 = vpack.c.b16 %v460, %v459
    %v566 = vpack.c.b16 %v462, %v461
    %v567 = vpack.c.b16 %v464, %v463
    %v568 = vpack.c.b16 %v466, %v465
    %v569 = vpack.c.b16 %v468, %v467
    %v570 = vpack.c.b16 %v470, %v469
    %v571 = vpack.c.b16 %v472, %v471
    %v572 = vpack.c.b16 %v474, %v473
    %v573 = vpack.c.b16 %v476, %v475
    %v574 = vpack.c.b16 %v478, %v477
    %v575 = vpack.c.b16 %v480, %v479
    %v576 = vpack.c.b16 %v482, %v481
    %v577 = vpack.c.b16 %v484, %v483
    %v578 = vpack.c.b16 %v486, %v485
    %v579 = vpack.c.b16 %v488, %v487
    %v580 = vpack.c.b16 %v490, %v489
    %v581 = vpack.c.b16 %v492, %v491
    %v582 = vpack.c.b16 %v494, %v493
    %v583 = vpack.c.b16 %v496, %v495
    %v584 = vpack.c.b16 %v498, %v497
    %v585 = vpack.c.b16 %v500, %v499
    %v586 = vpack.c.b16 %v502, %v501
    %v587 = vpack.c.b16 %v504, %v503
    %v588 = vpack.c.b16 %v506, %v505
    %v589 = vpack.c.b16 %v508, %v507
    %v590 = vpack.c.b16 %v510, %v509
    %v591 = vpack.c.b16 %v512, %v511
    %v592 = vpack.c.b16 %v514, %v513
    %v593 = vpack.c.b16 %v516, %v515
    %v594 = vpack.c.b16 %v518, %v517
    %v595 = vpack.c.b16 %v520, %v519
    %v596 = vpack.c.b16 %v522, %v521
    %v597 = vpack.c.b16 %v524, %v523
    %v598 = vpack.c.b16 %v526, %v525
    %v599 = vpack.c.b16 %v528, %v527
    %v600 = vpack.c.b16 %v530, %v529
    %v601 = vpack.c.b16 %v532, %v531
    %v602 = vpack.c.b16 %v534, %v533
    %v603 = vpack.c.b16 %v536, %v535
    %v604 = vpack.c.b16 %v538, %v537
    %v605 = vpack.c.b16 %v540, %v539
    %v606 = vpack.c.b16 %v542, %v541
    %671 = vmatprep.subr.bf16.mxu0 0
    %672 = vmatpush1.bf16.msra.mxu0 %v543
    %673 = vmatprep.subr.bf16.mxu0 0
    %674 = vmatpush1.bf16.msra.mxu0 %v544
    %675 = vmatprep.subr.bf16.mxu0 0
    %676 = vmatpush1.bf16.msra.mxu0 %v545
    %677 = vmatprep.subr.bf16.mxu0 0
    %678 = vmatpush1.bf16.msra.mxu0 %v546
    %679 = vmatprep.subr.bf16.mxu0 0
    %680 = vmatpush1.bf16.msra.mxu0 %v547
    %681 = vmatprep.subr.bf16.mxu0 0
    %682 = vmatpush1.bf16.msra.mxu0 %v548
    %683 = vmatprep.subr.bf16.mxu0 0
    %684 = vmatpush1.bf16.msra.mxu0 %v549
    %685 = vmatprep.subr.bf16.mxu0 0
    %686 = vmatpush1.bf16.msra.mxu0 %v550
    %687 = vmatprep.subr.bf16.mxu0 0
    %688 = vmatpush1.bf16.msra.mxu0 %v551
    %689 = vmatprep.subr.bf16.mxu0 0
    %690 = vmatpush1.bf16.msra.mxu0 %v552
    %691 = vmatprep.subr.bf16.mxu0 0
    %692 = vmatpush1.bf16.msra.mxu0 %v553
    %693 = vmatprep.subr.bf16.mxu0 0
    %694 = vmatpush1.bf16.msra.mxu0 %v554
    %695 = vmatprep.subr.bf16.mxu0 0
    %696 = vmatpush1.bf16.msra.mxu0 %v555
    %697 = vmatprep.subr.bf16.mxu0 0
    %698 = vmatpush1.bf16.msra.mxu0 %v556
    %699 = vmatprep.subr.bf16.mxu0 0
    %700 = vmatpush1.bf16.msra.mxu0 %v557
    %701 = vmatprep.subr.bf16.mxu0 0
    %702 = vmatpush1.bf16.msra.mxu0 %v558
    %703 = vmatprep.mubr.bf16.mxu0 %v267
    %704 = vmatmul.mubr.bf16.gmra.mrb[0].mxu0 %v253
    %v705 = vpop.f32.mrb[0].mxu0
    %v706 = vadd.f32 %v227, %v705
    %v707 = vpop.f32.mrb[0].mxu0
    %v708 = vpop.f32.mrb[0].mxu0
    %v709 = vpop.f32.mrb[0].mxu0
    %710 = vdwg.mxu0
    %711 = vmatprep.subr.bf16.mxu0 0
    %712 = vmatpush1.bf16.msra.mxu0 %v559
    %713 = vmatprep.subr.bf16.mxu0 0
    %714 = vmatpush1.bf16.msra.mxu0 %v560
    %715 = vmatprep.subr.bf16.mxu0 0
    %716 = vmatpush1.bf16.msra.mxu0 %v561
    %717 = vmatprep.subr.bf16.mxu0 0
    %718 = vmatpush1.bf16.msra.mxu0 %v562
    %719 = vmatprep.subr.bf16.mxu0 0
    %720 = vmatpush1.bf16.msra.mxu0 %v563
    %721 = vmatprep.subr.bf16.mxu0 0
    %722 = vmatpush1.bf16.msra.mxu0 %v564
    %723 = vmatprep.subr.bf16.mxu0 0
    %724 = vmatpush1.bf16.msra.mxu0 %v565
    %725 = vmatprep.subr.bf16.mxu0 0
    %726 = vmatpush1.bf16.msra.mxu0 %v566
    %727 = vmatprep.subr.bf16.mxu0 0
    %728 = vmatpush1.bf16.msra.mxu0 %v567
    %729 = vmatprep.subr.bf16.mxu0 0
    %730 = vmatpush1.bf16.msra.mxu0 %v568
    %731 = vmatprep.subr.bf16.mxu0 0
    %732 = vmatpush1.bf16.msra.mxu0 %v569
    %733 = vmatprep.subr.bf16.mxu0 0
    %734 = vmatpush1.bf16.msra.mxu0 %v570
    %735 = vmatprep.subr.bf16.mxu0 0
    %736 = vmatpush1.bf16.msra.mxu0 %v571
    %737 = vmatprep.subr.bf16.mxu0 0
    %738 = vmatpush1.bf16.msra.mxu0 %v572
    %739 = vmatprep.subr.bf16.mxu0 0
    %740 = vmatpush1.bf16.msra.mxu0 %v573
    %741 = vmatprep.subr.bf16.mxu0 0
    %742 = vmatpush1.bf16.msra.mxu0 %v574
    %743 = vmatprep.mubr.bf16.mxu0 %v277
    %744 = vmatmul.mubr.bf16.gmra.mrb[0].mxu0 %v275
    %v745 = vpop.f32.mrb[0].mxu0
    %v746 = vadd.f32 %v706, %v745
    %v747 = vpop.f32.mrb[0].mxu0
    %v748 = vpop.f32.mrb[0].mxu0
    %v749 = vpop.f32.mrb[0].mxu0
    %750 = vdwg.mxu0
    %751 = vmatprep.subr.bf16.mxu0 0
    %752 = vmatpush1.bf16.msra.mxu0 %v575
    %753 = vmatprep.subr.bf16.mxu0 0
    %754 = vmatpush1.bf16.msra.mxu0 %v576
    %755 = vmatprep.subr.bf16.mxu0 0
    %756 = vmatpush1.bf16.msra.mxu0 %v577
    %757 = vmatprep.subr.bf16.mxu0 0
    %758 = vmatpush1.bf16.msra.mxu0 %v578
    %759 = vmatprep.subr.bf16.mxu0 0
    %760 = vmatpush1.bf16.msra.mxu0 %v579
    %761 = vmatprep.subr.bf16.mxu0 0
    %762 = vmatpush1.bf16.msra.mxu0 %v580
    %763 = vmatprep.subr.bf16.mxu0 0
    %764 = vmatpush1.bf16.msra.mxu0 %v581
    %765 = vmatprep.subr.bf16.mxu0 0
    %766 = vmatpush1.bf16.msra.mxu0 %v582
    %767 = vmatprep.subr.bf16.mxu0 0
    %768 = vmatpush1.bf16.msra.mxu0 %v583
    %769 = vmatprep.subr.bf16.mxu0 0
    %770 = vmatpush1.bf16.msra.mxu0 %v584
    %771 = vmatprep.subr.bf16.mxu0 0
    %772 = vmatpush1.bf16.msra.mxu0 %v585
    %773 = vmatprep.subr.bf16.mxu0 0
    %774 = vmatpush1.bf16.msra.mxu0 %v586
    %775 = vmatprep.subr.bf16.mxu0 0
    %776 = vmatpush1.bf16.msra.mxu0 %v587
    %777 = vmatprep.subr.bf16.mxu0 0
    %778 = vmatpush1.bf16.msra.mxu0 %v588
    %779 = vmatprep.subr.bf16.mxu0 0
    %780 = vmatpush1.bf16.msra.mxu0 %v589
    %781 = vmatprep.subr.bf16.mxu0 0
    %782 = vmatpush1.bf16.msra.mxu0 %v590
    %783 = vmatprep.mubr.bf16.mxu0 %v274
    %784 = vmatmul.mubr.bf16.gmra.mrb[0].mxu0 %v260
    %v785 = vpop.f32.mrb[0].mxu0
    %v786 = vadd.f32 %v746, %v785
    %v787 = vpop.f32.mrb[0].mxu0
    %v788 = vpop.f32.mrb[0].mxu0
    %v789 = vpop.f32.mrb[0].mxu0
    %790 = vdwg.mxu0
    %791 = vmatprep.subr.bf16.mxu0 0
    %792 = vmatpush1.bf16.msra.mxu0 %v591
    %793 = vmatprep.subr.bf16.mxu0 0
    %794 = vmatpush1.bf16.msra.mxu0 %v592
    %795 = vmatprep.subr.bf16.mxu0 0
    %796 = vmatpush1.bf16.msra.mxu0 %v593
    %797 = vmatprep.subr.bf16.mxu0 0
    %798 = vmatpush1.bf16.msra.mxu0 %v594
    %799 = vmatprep.subr.bf16.mxu0 0
    %800 = vmatpush1.bf16.msra.mxu0 %v595
    %801 = vmatprep.subr.bf16.mxu0 0
    %802 = vmatpush1.bf16.msra.mxu0 %v596
    %803 = vmatprep.subr.bf16.mxu0 0
    %804 = vmatpush1.bf16.msra.mxu0 %v597
    %805 = vmatprep.subr.bf16.mxu0 0
    %806 = vmatpush1.bf16.msra.mxu0 %v598
    %807 = vmatprep.subr.bf16.mxu0 0
    %808 = vmatpush1.bf16.msra.mxu0 %v599
    %809 = vmatprep.subr.bf16.mxu0 0
    %810 = vmatpush1.bf16.msra.mxu0 %v600
    %811 = vmatprep.subr.bf16.mxu0 0
    %812 = vmatpush1.bf16.msra.mxu0 %v601
    %813 = vmatprep.subr.bf16.mxu0 0
    %814 = vmatpush1.bf16.msra.mxu0 %v602
    %815 = vmatprep.subr.bf16.mxu0 0
    %816 = vmatpush1.bf16.msra.mxu0 %v603
    %817 = vmatprep.subr.bf16.mxu0 0
    %818 = vmatpush1.bf16.msra.mxu0 %v604
    %819 = vmatprep.subr.bf16.mxu0 0
    %820 = vmatpush1.bf16.msra.mxu0 %v605
    %821 = vmatprep.subr.bf16.mxu0 0
    %822 = vmatpush1.bf16.msra.mxu0 %v606
    %823 = vmatprep.mubr.bf16.mxu0 %v278
    %824 = vmatmul.mubr.bf16.gmra.mrb[0].mxu0 %v276
    %v825 = vpop.f32.mrb[0].mxu0
    %v826 = vadd.f32 %v786, %v825
    %v827 = vpop.f32.mrb[0].mxu0
    %v828 = vpop.f32.mrb[0].mxu0
    %v829 = vpop.f32.mrb[0].mxu0
    %830 = vdwg.mxu0
    %v831 = vmax.f32 %v826, 0.0
    %v832 = vpack.c.bf16 %v831, %v831
    %v834 = vlaneseq
    %v835 = vshrl.u32 %v834, 7
    %v836 = vsub.s32 0, %v835
    %v837 = vrot.slane %v221, %v836
    %v855 = vunpack.c.l.b16 %v205
    %v856 = vunpack.c.l.b16 %v206
    %v857 = vunpack.c.l.b16 %v207
    %v858 = vunpack.c.l.b16 %v208
    %v859 = vunpack.c.l.b16 %v209
    %v860 = vunpack.c.l.b16 %v210
    %v861 = vunpack.c.l.b16 %v211
    %v862 = vunpack.c.l.b16 %v212
    %v863 = vunpack.c.l.b16 %v213
    %v864 = vunpack.c.l.b16 %v214
    %v865 = vunpack.c.l.b16 %v215
    %v866 = vunpack.c.l.b16 %v216
    %v867 = vunpack.c.l.b16 %v217
    %v868 = vunpack.c.l.b16 %v218
    %v869 = vunpack.c.l.b16 %v219
    %v870 = vunpack.c.l.b16 %v220
    %v871 = vpack.c.b16 %v856, %v855
    %v872 = vpack.c.b16 %v858, %v857
    %v873 = vpack.c.b16 %v860, %v859
    %v874 = vpack.c.b16 %v862, %v861
    %v875 = vpack.c.b16 %v864, %v863
    %v876 = vpack.c.b16 %v866, %v865
    %v877 = vpack.c.b16 %v868, %v867
    %v878 = vpack.c.b16 %v870, %v869
    %887 = vmatprep.subr.bf16.mxu0 0
    %888 = vmatpush1.bf16.msra.mxu0 %v871
    %889 = vmatprep.subr.bf16.mxu0 0
    %890 = vmatpush1.bf16.msra.mxu0 %v872
    %891 = vmatprep.subr.bf16.mxu0 0
    %892 = vmatpush1.bf16.msra.mxu0 %v873
    %893 = vmatprep.subr.bf16.mxu0 0
    %894 = vmatpush1.bf16.msra.mxu0 %v874
    %895 = vmatprep.subr.bf16.mxu0 0
    %896 = vmatpush1.bf16.msra.mxu0 %v875
    %897 = vmatprep.subr.bf16.mxu0 0
    %898 = vmatpush1.bf16.msra.mxu0 %v876
    %899 = vmatprep.subr.bf16.mxu0 0
    %900 = vmatpush1.bf16.msra.mxu0 %v877
    %901 = vmatprep.subr.bf16.mxu0 0
    %902 = vmatpush1.bf16.msra.mxu0 %v878
    %903 = vmatprep.subr.bf16.mxu0 0
    %904 = vmatpush1.bf16.msra.mxu0 0
    %905 = vmatprep.subr.bf16.mxu0 0
    %906 = vmatpush1.bf16.msra.mxu0 0
    %907 = vmatprep.subr.bf16.mxu0 0
    %908 = vmatpush1.bf16.msra.mxu0 0
    %909 = vmatprep.subr.bf16.mxu0 0
    %910 = vmatpush1.bf16.msra.mxu0 0
    %911 = vmatprep.subr.bf16.mxu0 0
    %912 = vmatpush1.bf16.msra.mxu0 0
    %913 = vmatprep.subr.bf16.mxu0 0
    %914 = vmatpush1.bf16.msra.mxu0 0
    %915 = vmatprep.subr.bf16.mxu0 0
    %916 = vmatpush1.bf16.msra.mxu0 0
    %917 = vmatprep.subr.bf16.mxu0 0
    %918 = vmatpush1.bf16.msra.mxu0 0
    %919 = vmatprep.mubr.bf16.mxu0 0
    %920 = vmatmul.mubr.bf16.gmra.mrb[0].mxu0 %v832
    %v921 = vpop.f32.mrb[0].mxu0
    %v922 = vadd.f32 %v837, %v921
    %v923 = vpop.f32.mrb[0].mxu0
    %v924 = vpop.f32.mrb[0].mxu0
    %v925 = vpop.f32.mrb[0].mxu0
    %926 = vdwg.mxu0
    %v927 = vld [vmem:[#allocation5] sm:$0xff]
    %v929 = vcombine.high %v927, %v927
    %v931 = vunpack.c.l.s4 1966171168
    %v932 = vunpack.c.0.s8 %v931
    %v933 = vlaneseq
    %v934 = vshrl.u32 %v933, 7
    %v935 = vsub.s32 %v932, %v934
    %v936 = vrot.slane %v927, %v935
    %v938 = vunpack.c.l.s4 1966171168
    %v939 = vunpack.c.0.s8 %v938
    %v940 = vlaneseq
    %v941 = vshrl.u32 %v940, 7
    %v942 = vsub.s32 %v939, %v941
    %v943 = vrot.slane %v929, %v942
    %v944 = vcombine.high %v936, %v936
    %v945 = vcombine.high %v943, %v943
    %v947 = vunpack.c.l.s4 1966171168
    %v948 = vunpack.c.0.s8 %v947
    %v949 = vlaneseq
    %v950 = vshrl.u32 %v949, 7
    %v951 = vsub.s32 %v948, %v950
    %v952 = vrot.slane %v936, %v951
    %v954 = vunpack.c.l.s4 1966171168
    %v955 = vunpack.c.0.s8 %v954
    %v956 = vlaneseq
    %v957 = vshrl.u32 %v956, 7
    %v958 = vsub.s32 %v955, %v957
    %v959 = vrot.slane %v943, %v958
    %v961 = vunpack.c.l.s4 1966171168
    %v962 = vunpack.c.0.s8 %v961
    %v963 = vlaneseq
    %v964 = vshrl.u32 %v963, 7
    %v965 = vsub.s32 %v962, %v964
    %v966 = vrot.slane %v944, %v965
    %v968 = vunpack.c.l.s4 1966171168
    %v969 = vunpack.c.0.s8 %v968
    %v970 = vlaneseq
    %v971 = vshrl.u32 %v970, 7
    %v972 = vsub.s32 %v969, %v971
    %v973 = vrot.slane %v945, %v972
    %v974 = vcombine.high %v952, %v952
    %v975 = vcombine.high %v959, %v959
    %v976 = vcombine.high %v966, %v966
    %v977 = vcombine.high %v973, %v973
    %986 = vmatprep.subr.bf16.mxu0 0
    %987 = vmatpush1.bf16.msra.mxu0 %v543
    %988 = vmatprep.subr.bf16.mxu0 0
    %989 = vmatpush1.bf16.msra.mxu0 %v544
    %990 = vmatprep.subr.bf16.mxu0 0
    %991 = vmatpush1.bf16.msra.mxu0 %v545
    %992 = vmatprep.subr.bf16.mxu0 0
    %993 = vmatpush1.bf16.msra.mxu0 %v546
    %994 = vmatprep.subr.bf16.mxu0 0
    %995 = vmatpush1.bf16.msra.mxu0 %v547
    %996 = vmatprep.subr.bf16.mxu0 0
    %997 = vmatpush1.bf16.msra.mxu0 %v548
    %998 = vmatprep.subr.bf16.mxu0 0
    %999 = vmatpush1.bf16.msra.mxu0 %v549
    %1000 = vmatprep.subr.bf16.mxu0 0
    %1001 = vmatpush1.bf16.msra.mxu0 %v550
    %1002 = vmatprep.subr.bf16.mxu0 0
    %1003 = vmatpush1.bf16.msra.mxu0 %v551
    %1004 = vmatprep.subr.bf16.mxu0 0
    %1005 = vmatpush1.bf16.msra.mxu0 %v552
    %1006 = vmatprep.subr.bf16.mxu0 0
    %1007 = vmatpush1.bf16.msra.mxu0 %v553
    %1008 = vmatprep.subr.bf16.mxu0 0
    %1009 = vmatpush1.bf16.msra.mxu0 %v554
    %1010 = vmatprep.subr.bf16.mxu0 0
    %1011 = vmatpush1.bf16.msra.mxu0 %v555
    %1012 = vmatprep.subr.bf16.mxu0 0
    %1013 = vmatpush1.bf16.msra.mxu0 %v556
    %1014 = vmatprep.subr.bf16.mxu0 0
    %1015 = vmatpush1.bf16.msra.mxu0 %v557
    %1016 = vmatprep.subr.bf16.mxu0 0
    %1017 = vmatpush1.bf16.msra.mxu0 %v558
    %1018 = vmatprep.mubr.bf16.mxu0 %v966
    %1019 = vmatmul.mubr.bf16.gmra.mrb[0].mxu0 %v952
    %v1020 = vpop.f32.mrb[0].mxu0
    %v1021 = vadd.f32 %v227, %v1020
    %v1022 = vpop.f32.mrb[0].mxu0
    %v1023 = vpop.f32.mrb[0].mxu0
    %v1024 = vpop.f32.mrb[0].mxu0
    %1025 = vdwg.mxu0
    %1026 = vmatprep.subr.bf16.mxu0 0
    %1027 = vmatpush1.bf16.msra.mxu0 %v559
    %1028 = vmatprep.subr.bf16.mxu0 0
    %1029 = vmatpush1.bf16.msra.mxu0 %v560
    %1030 = vmatprep.subr.bf16.mxu0 0
    %1031 = vmatpush1.bf16.msra.mxu0 %v561
    %1032 = vmatprep.subr.bf16.mxu0 0
    %1033 = vmatpush1.bf16.msra.mxu0 %v562
    %1034 = vmatprep.subr.bf16.mxu0 0
    %1035 = vmatpush1.bf16.msra.mxu0 %v563
    %1036 = vmatprep.subr.bf16.mxu0 0
    %1037 = vmatpush1.bf16.msra.mxu0 %v564
    %1038 = vmatprep.subr.bf16.mxu0 0
    %1039 = vmatpush1.bf16.msra.mxu0 %v565
    %1040 = vmatprep.subr.bf16.mxu0 0
    %1041 = vmatpush1.bf16.msra.mxu0 %v566
    %1042 = vmatprep.subr.bf16.mxu0 0
    %1043 = vmatpush1.bf16.msra.mxu0 %v567
    %1044 = vmatprep.subr.bf16.mxu0 0
    %1045 = vmatpush1.bf16.msra.mxu0 %v568
    %1046 = vmatprep.subr.bf16.mxu0 0
    %1047 = vmatpush1.bf16.msra.mxu0 %v569
    %1048 = vmatprep.subr.bf16.mxu0 0
    %1049 = vmatpush1.bf16.msra.mxu0 %v570
    %1050 = vmatprep.subr.bf16.mxu0 0
    %1051 = vmatpush1.bf16.msra.mxu0 %v571
    %1052 = vmatprep.subr.bf16.mxu0 0
    %1053 = vmatpush1.bf16.msra.mxu0 %v572
    %1054 = vmatprep.subr.bf16.mxu0 0
    %1055 = vmatpush1.bf16.msra.mxu0 %v573
    %1056 = vmatprep.subr.bf16.mxu0 0
    %1057 = vmatpush1.bf16.msra.mxu0 %v574
    %1058 = vmatprep.mubr.bf16.mxu0 %v976
    %1059 = vmatmul.mubr.bf16.gmra.mrb[0].mxu0 %v974
    %v1060 = vpop.f32.mrb[0].mxu0
    %v1061 = vadd.f32 %v1021, %v1060
    %v1062 = vpop.f32.mrb[0].mxu0
    %v1063 = vpop.f32.mrb[0].mxu0
    %v1064 = vpop.f32.mrb[0].mxu0
    %1065 = vdwg.mxu0
    %1066 = vmatprep.subr.bf16.mxu0 0
    %1067 = vmatpush1.bf16.msra.mxu0 %v575
    %1068 = vmatprep.subr.bf16.mxu0 0
    %1069 = vmatpush1.bf16.msra.mxu0 %v576
    %1070 = vmatprep.subr.bf16.mxu0 0
    %1071 = vmatpush1.bf16.msra.mxu0 %v577
    %1072 = vmatprep.subr.bf16.mxu0 0
    %1073 = vmatpush1.bf16.msra.mxu0 %v578
    %1074 = vmatprep.subr.bf16.mxu0 0
    %1075 = vmatpush1.bf16.msra.mxu0 %v579
    %1076 = vmatprep.subr.bf16.mxu0 0
    %1077 = vmatpush1.bf16.msra.mxu0 %v580
    %1078 = vmatprep.subr.bf16.mxu0 0
    %1079 = vmatpush1.bf16.msra.mxu0 %v581
    %1080 = vmatprep.subr.bf16.mxu0 0
    %1081 = vmatpush1.bf16.msra.mxu0 %v582
    %1082 = vmatprep.subr.bf16.mxu0 0
    %1083 = vmatpush1.bf16.msra.mxu0 %v583
    %1084 = vmatprep.subr.bf16.mxu0 0
    %1085 = vmatpush1.bf16.msra.mxu0 %v584
    %1086 = vmatprep.subr.bf16.mxu0 0
    %1087 = vmatpush1.bf16.msra.mxu0 %v585
    %1088 = vmatprep.subr.bf16.mxu0 0
    %1089 = vmatpush1.bf16.msra.mxu0 %v586
    %1090 = vmatprep.subr.bf16.mxu0 0
    %1091 = vmatpush1.bf16.msra.mxu0 %v587
    %1092 = vmatprep.subr.bf16.mxu0 0
    %1093 = vmatpush1.bf16.msra.mxu0 %v588
    %1094 = vmatprep.subr.bf16.mxu0 0
    %1095 = vmatpush1.bf16.msra.mxu0 %v589
    %1096 = vmatprep.subr.bf16.mxu0 0
    %1097 = vmatpush1.bf16.msra.mxu0 %v590
    %1098 = vmatprep.mubr.bf16.mxu0 %v973
    %1099 = vmatmul.mubr.bf16.gmra.mrb[0].mxu0 %v959
    %v1100 = vpop.f32.mrb[0].mxu0
    %v1101 = vadd.f32 %v1061, %v1100
    %v1102 = vpop.f32.mrb[0].mxu0
    %v1103 = vpop.f32.mrb[0].mxu0
    %v1104 = vpop.f32.mrb[0].mxu0
    %1105 = vdwg.mxu0
    %1106 = vmatprep.subr.bf16.mxu0 0
    %1107 = vmatpush1.bf16.msra.mxu0 %v591
    %1108 = vmatprep.subr.bf16.mxu0 0
    %1109 = vmatpush1.bf16.msra.mxu0 %v592
    %1110 = vmatprep.subr.bf16.mxu0 0
    %1111 = vmatpush1.bf16.msra.mxu0 %v593
    %1112 = vmatprep.subr.bf16.mxu0 0
    %1113 = vmatpush1.bf16.msra.mxu0 %v594
    %1114 = vmatprep.subr.bf16.mxu0 0
    %1115 = vmatpush1.bf16.msra.mxu0 %v595
    %1116 = vmatprep.subr.bf16.mxu0 0
    %1117 = vmatpush1.bf16.msra.mxu0 %v596
    %1118 = vmatprep.subr.bf16.mxu0 0
    %1119 = vmatpush1.bf16.msra.mxu0 %v597
    %1120 = vmatprep.subr.bf16.mxu0 0
    %1121 = vmatpush1.bf16.msra.mxu0 %v598
    %1122 = vmatprep.subr.bf16.mxu0 0
    %1123 = vmatpush1.bf16.msra.mxu0 %v599
    %1124 = vmatprep.subr.bf16.mxu0 0
    %1125 = vmatpush1.bf16.msra.mxu0 %v600
    %1126 = vmatprep.subr.bf16.mxu0 0
    %1127 = vmatpush1.bf16.msra.mxu0 %v601
    %1128 = vmatprep.subr.bf16.mxu0 0
    %1129 = vmatpush1.bf16.msra.mxu0 %v602
    %1130 = vmatprep.subr.bf16.mxu0 0
    %1131 = vmatpush1.bf16.msra.mxu0 %v603
    %1132 = vmatprep.subr.bf16.mxu0 0
    %1133 = vmatpush1.bf16.msra.mxu0 %v604
    %1134 = vmatprep.subr.bf16.mxu0 0
    %1135 = vmatpush1.bf16.msra.mxu0 %v605
    %1136 = vmatprep.subr.bf16.mxu0 0
    %1137 = vmatpush1.bf16.msra.mxu0 %v606
    %1138 = vmatprep.mubr.bf16.mxu0 %v977
    %1139 = vmatmul.mubr.bf16.gmra.mrb[0].mxu0 %v975
    %v1140 = vpop.f32.mrb[0].mxu0
    %v1141 = vadd.f32 %v1101, %v1140
    %v1142 = vpop.f32.mrb[0].mxu0
    %v1143 = vpop.f32.mrb[0].mxu0
    %v1144 = vpop.f32.mrb[0].mxu0
    %1145 = vdwg.mxu0
    %v1146 = vmax.f32 %v1141, 0.0
    %v1147 = vpack.c.bf16 %v1146, %v1146
    %1148 = vmatprep.subr.bf16.mxu0 0
    %1149 = vmatpush1.bf16.msra.mxu0 %v871
    %1150 = vmatprep.subr.bf16.mxu0 0
    %1151 = vmatpush1.bf16.msra.mxu0 %v872
    %1152 = vmatprep.subr.bf16.mxu0 0
    %1153 = vmatpush1.bf16.msra.mxu0 %v873
    %1154 = vmatprep.subr.bf16.mxu0 0
    %1155 = vmatpush1.bf16.msra.mxu0 %v874
    %1156 = vmatprep.subr.bf16.mxu0 0
    %1157 = vmatpush1.bf16.msra.mxu0 %v875
    %1158 = vmatprep.subr.bf16.mxu0 0
    %1159 = vmatpush1.bf16.msra.mxu0 %v876
    %1160 = vmatprep.subr.bf16.mxu0 0
    %1161 = vmatpush1.bf16.msra.mxu0 %v877
    %1162 = vmatprep.subr.bf16.mxu0 0
    %1163 = vmatpush1.bf16.msra.mxu0 %v878
    %1164 = vmatprep.subr.bf16.mxu0 0
    %1165 = vmatpush1.bf16.msra.mxu0 0
    %1166 = vmatprep.subr.bf16.mxu0 0
    %1167 = vmatpush1.bf16.msra.mxu0 0
    %1168 = vmatprep.subr.bf16.mxu0 0
    %1169 = vmatpush1.bf16.msra.mxu0 0
    %1170 = vmatprep.subr.bf16.mxu0 0
    %1171 = vmatpush1.bf16.msra.mxu0 0
    %1172 = vmatprep.subr.bf16.mxu0 0
    %1173 = vmatpush1.bf16.msra.mxu0 0
    %1174 = vmatprep.subr.bf16.mxu0 0
    %1175 = vmatpush1.bf16.msra.mxu0 0
    %1176 = vmatprep.subr.bf16.mxu0 0
    %1177 = vmatpush1.bf16.msra.mxu0 0
    %1178 = vmatprep.subr.bf16.mxu0 0
    %1179 = vmatpush1.bf16.msra.mxu0 0
    %1180 = vmatprep.mubr.bf16.mxu0 0
    %1181 = vmatmul.mubr.bf16.gmra.mrb[0].mxu0 %v1147
    %v1182 = vpop.f32.mrb[0].mxu0
    %v1183 = vadd.f32 %v837, %v1182
    %v1184 = vpop.f32.mrb[0].mxu0
    %v1185 = vpop.f32.mrb[0].mxu0
    %v1186 = vpop.f32.mrb[0].mxu0
    %1187 = vdwg.mxu0
    %v1188 = vlaneseq
    %v1189 = vand.u32 %v1188, 127
    %vm1190 = vcmp.lt.s32.totalorder %v1189, 32
    %v1191 = vsub.f32 %v922, %v1183
    %v1192 = vadd.f32 %v1191, 1e-06
    %v1193 = vsel %vm1190, %v1192, 0.0
    %v1194 = vmul.f32 %v1193, %v1193
    %vm1195 = vcmask 1041408
    %v1196 = vsel %vm1195, %v1194, 0.0
    %1197 = vadd.xlane.f32.xlu0 %v1196
    %v1198 = vpop.xlane.xlu0 %1197
    %v1199 = vrsqrt.pop %v1198
    %v1200 = vmul.f32 %v1198, %v1199
    %vm1201 = vcmp.eq.f32.partialorder %v1198, inf
    %v1202 = vsel %vm1201, %v1198, %v1200
    %vm1203 = vcmp.eq.f32.partialorder %v1198, 0.0
    %v1204 = vand.u32 %v1198, 2147483648
    %v1205 = vsel %vm1203, %v1204, %v1202
    %1206 = vst [vmem:[#allocation10] sm:$0x3] %v1205
    // Predicated region
    $region42: #{tpu_custom_call.1} parent=1 // pred_check
      _
    $region43: #{tpu_custom_call.1} parent=1 // pred_check_branch
      %1208 = sbr.rel (0) target = $region45
    $region44: #{tpu_custom_call.1} parent=1 // pred_region
      %s1210 = ssub.s32 32, 32
      %1211 = vsyncadd [#allocation4], %s1210
      %s1213 = sshll.u32 [#allocation10], 4
      %s1214 = int_to_ptr.vmem [resolvable:$true] %s1213
      %1216 = dma.vmem_to_hbm [thread:$0]  %s1214, 32, %s6, [#allocation4]
    $region45: #{tpu_custom_call.1} parent=1 // pred_fallthru
      _
    // Predicated region
    $region46: #{tpu_custom_call.1} parent=1 // pred_check
      _
    $region47: #{tpu_custom_call.1} parent=1 // pred_check_branch
      %1218 = sbr.rel (0) target = $region49
    $region48: #{tpu_custom_call.1} parent=1 // pred_region
      %1219 = dma.done [#allocation4], 32
    $region49: #{tpu_custom_call.1} parent=1 // pred_fallthru
      _
    %1220 = vsyncpa [#allocation3], 1
    %1221 = vsyncpa [#allocation6], 1
    %1222 = vsyncpa [#allocation9], 1
    %1223 = vsyncpa [#allocation4], 1

</llo_original>
